<compile_context>
chip_gen: v5e
topology: v5e:2x2
jax: 0.10.0
libtpu: 0.0.40
codegen_flags: <defaults>
</compile_context>

<pallas_src>
import functools

import jax
import jax.numpy as jnp
from jax.experimental import pallas as pl
from jax.experimental.pallas import tpu as pltpu  # noqa: F401  (TPU backend)

F_PAD = 128   # lane-dense padded filter dim
C_PAD = 128   # lane-dense padded class dim


# ----------------------------------------------------------------------------
# Fused kernel: embedding (one-hot matmul) -> per-branch im2col conv + bias +
# ReLU + max-over-time -> concat -> final linear.  Everything stays in VMEM.
#
# refs layout (n = len(kernel_sizes)):
#   refs[0]            tok_ref   (B, L, 1)        int32
#   refs[1]            emb_ref   (V, E)           f32
#   refs[2 : 2+n]      conv w_i  (k_i*E, F_PAD)   f32  (tap-major rows, zero-padded lanes)
#   refs[2+n : 2+2n]   conv b_i  (1, F_PAD)       f32
#   refs[2+2n]         fc_w      (n*F_PAD, C_PAD) f32
#   refs[3+2n]         fc_b      (1, C_PAD)       f32
#   refs[4+2n]         o_ref     (B, C_PAD)       f32
# ----------------------------------------------------------------------------
def _fused_textcnn_kernel(*refs, kernel_sizes, B, L):
    n = len(kernel_sizes)
    tok_ref, emb_ref = refs[0], refs[1]
    conv_w_refs = refs[2:2 + n]
    conv_b_refs = refs[2 + n:2 + 2 * n]
    fcw_ref, fcb_ref = refs[2 + 2 * n], refs[3 + 2 * n]
    o_ref = refs[4 + 2 * n]

    V, E = emb_ref.shape

    # --- embedding lookup as a one-hot MXU matmul (exact, no gather) ---------
    tok = tok_ref[...]                                              # (B, L, 1) int32
    vocab_ids = jax.lax.broadcasted_iota(jnp.int32, (B, L, V), 2)   # lane iota
    onehot = jnp.where(tok == vocab_ids, 1.0, 0.0).astype(jnp.float32)  # (B, L, V)
    x = jax.lax.dot_general(                                        # (B, L, E)
        onehot, emb_ref[...],
        dimension_numbers=(((2,), (0,)), ((), ())),
        preferred_element_type=jnp.float32)

    # --- conv branches: im2col once, single (k*E)-deep matmul ----------------
    pooled = []
    for i, k in enumerate(kernel_sizes):
        Lout = L - k + 1
        # im2col: concat the k shifted views along the lane (E) axis, built once.
        cols = [jax.lax.slice(x, (0, j, 0), (B, j + Lout, E)) for j in range(k)]
        xcat = jnp.concatenate(cols, axis=-1)                       # (B, Lout, k*E)
        acc = jax.lax.dot_general(                                  # (B, Lout, F_PAD)
            xcat, conv_w_refs[i][...],
            dimension_numbers=(((2,), (0,)), ((), ())),
            preferred_element_type=jnp.float32)
        acc = jnp.maximum(acc + conv_b_refs[i][...], 0.0)           # bias + ReLU
        pooled.append(jnp.max(acc, axis=1))                         # max over time -> (B, F_PAD)

    # --- final linear (padded lanes carry exact zeros, so this is exact) -----
    feats = jnp.concatenate(pooled, axis=-1)                        # (B, n*F_PAD)
    y = jnp.dot(feats, fcw_ref[...], preferred_element_type=jnp.float32)
    o_ref[...] = (y + fcb_ref[...]).astype(o_ref.dtype)             # (B, C_PAD)


def _full_block_spec(shape):
    nd = len(shape)
    return pl.BlockSpec(tuple(shape), lambda *_, _nd=nd: (0,) * _nd)


# ----------------------------------------------------------------------------
# One-time parameter repacking (hoisted out of the hot path).
#   conv w: PyTorch (F, 1, k, E) -> tap-major (k*E, F) -> zero-pad to (k*E, F_PAD)
#   fc    : PyTorch (C, n*F)     -> (n*F_PAD, C_PAD) matching the padded concat
# ----------------------------------------------------------------------------
def prepare_params(embed_table, conv_ws, conv_bs, fc_w, fc_b, kernel_sizes):
    E = embed_table.shape[1]
    F = conv_ws[0].shape[0]
    C = fc_w.shape[0]
    n = len(kernel_sizes)

    conv_w_packed, conv_b_packed = [], []
    for k, w, b in zip(kernel_sizes, conv_ws, conv_bs):
        w_kef = jnp.transpose(w[:, 0, :, :], (1, 2, 0)).reshape(k * E, F)   # row j*E+e = w[f,0,j,e]
        conv_w_packed.append(
            jnp.zeros((k * E, F_PAD), jnp.float32).at[:, :F].set(w_kef))
        conv_b_packed.append(
            jnp.zeros((1, F_PAD), jnp.float32).at[0, :F].set(b.astype(jnp.float32)))

    fc_w_t = fc_w.T.reshape(n, F, C)                                        # [i, f, c] = fc_w[c, i*F+f]
    fc_w_packed = (jnp.zeros((n, F_PAD, C_PAD), jnp.float32)
                   .at[:, :F, :C].set(fc_w_t)
                   .reshape(n * F_PAD, C_PAD))
    fc_b_packed = jnp.zeros((1, C_PAD), jnp.float32).at[0, :C].set(fc_b.astype(jnp.float32))

    return {
        "embed": embed_table.astype(jnp.float32),
        "conv_w": conv_w_packed,
        "conv_b": conv_b_packed,
        "fc_w": fc_w_packed,
        "fc_b": fc_b_packed,
    }


# ----------------------------------------------------------------------------
# Full forward (mirrors ConvolutionalNeuralNetwork.forward) — single pallas_call.
# ----------------------------------------------------------------------------
def textcnn_forward(tokens, params, kernel_sizes, num_classes):
    B, L = tokens.shape
    embed = params["embed"]
    V, E = embed.shape
    n = len(kernel_sizes)

    tok3d = tokens.reshape(B, L, 1).astype(jnp.int32)
    inputs = ([tok3d, embed]
              + list(params["conv_w"]) + list(params["conv_b"])
              + [params["fc_w"], params["fc_b"]])

    # Advisory cost estimate so XLA schedules neighbors around the custom call.
    flops = 2.0 * B * L * V * E
    for k in kernel_sizes:
        flops += 2.0 * B * (L - k + 1) * (k * E) * F_PAD
    flops += 2.0 * B * (n * F_PAD) * C_PAD
    bytes_accessed = sum(int(a.size) * a.dtype.itemsize for a in inputs) + B * C_PAD * 4

    kern = functools.partial(_fused_textcnn_kernel,
                             kernel_sizes=tuple(kernel_sizes), B=B, L=L)

    out_pad = pl.pallas_call(
        kern,
        out_shape=jax.ShapeDtypeStruct((B, C_PAD), jnp.float32),
        in_specs=[_full_block_spec(a.shape) for a in inputs],
        out_specs=_full_block_spec((B, C_PAD)),
        cost_estimate=pl.CostEstimate(flops=int(flops), transcendentals=0,
                                      bytes_accessed=int(bytes_accessed)),
    )(*inputs)

    return out_pad[:, :num_classes]


# ----------------------------------------------------------------------------
# Pure-JAX reference for correctness check (unpadded / un-repacked params).
# ----------------------------------------------------------------------------
def cnn_reference(tokens, embed_table, conv_ws, conv_bs, fc_w, fc_b, kernel_sizes):
    x = jnp.take(embed_table, tokens, axis=0)                # (B, L, E)
    B, L, E = x.shape
    feats = []
    for k, w, b in zip(kernel_sizes, conv_ws, conv_bs):
        Lout = L - k + 1
        windows = jnp.stack([x[:, t:t + k, :] for t in range(Lout)], axis=1)  # (B,Lout,k,E)
        s = jnp.einsum("btke,fke->btf", windows, w[:, 0]) + b                 # (B,Lout,F)
        s = jnp.maximum(s, 0.0)
        feats.append(jnp.max(s, axis=1))                                      # (B,F)
    feats = jnp.concatenate(feats, axis=1)
    return feats @ fc_w.T + fc_b


if __name__ == "__main__":
    # Model hyperparameters (small, consistent with the module's __init__)
    vocab_size = 50
    embed_dim = 32
    num_classes = 5
    kernel_sizes = (2, 3, 4)
    num_filters = 8
    B, L = 2, 8

    key = jax.random.PRNGKey(0)
    keys = jax.random.split(key, 10)

    embed_table = jax.random.normal(keys[0], (vocab_size, embed_dim), jnp.float32)
    conv_ws, conv_bs = [], []
    for i, k in enumerate(kernel_sizes):
        conv_ws.append(0.1 * jax.random.normal(
            keys[1 + i], (num_filters, 1, k, embed_dim), jnp.float32))
        conv_bs.append(0.1 * jax.random.normal(
            keys[4 + i], (num_filters,), jnp.float32))
    fc_w = 0.1 * jax.random.normal(
        keys[7], (num_classes, len(kernel_sizes) * num_filters), jnp.float32)
    fc_b = 0.1 * jax.random.normal(keys[8], (num_classes,), jnp.float32)

    tokens = jax.random.randint(keys[9], (B, L), 0, vocab_size, dtype=jnp.int32)

    params = prepare_params(embed_table, conv_ws, conv_bs, fc_w, fc_b, kernel_sizes)
    out = textcnn_forward(tokens, params, kernel_sizes, num_classes)
    out = jax.block_until_ready(out)
    assert out.shape == (B, num_classes), out.shape

    ref = cnn_reference(tokens, embed_table, conv_ws, conv_bs, fc_w, fc_b, kernel_sizes)
    assert jnp.allclose(out, ref, atol=1e-4, rtol=1e-4), (out, ref)

    print("KERNEL_OK")
</pallas_src>

<mosaic_0001>
module attributes {stable_mosaic.version = 11 : i64} {
  func.func @_fused_textcnn_kernel(%arg0: memref<2x8x1xi32, #tpu.memory_space<vmem>>, %arg1: memref<50x32xf32, #tpu.memory_space<vmem>>, %arg2: memref<64x128xf32, #tpu.memory_space<vmem>>, %arg3: memref<96x128xf32, #tpu.memory_space<vmem>>, %arg4: memref<128x128xf32, #tpu.memory_space<vmem>>, %arg5: memref<1x128xf32, #tpu.memory_space<vmem>>, %arg6: memref<1x128xf32, #tpu.memory_space<vmem>>, %arg7: memref<1x128xf32, #tpu.memory_space<vmem>>, %arg8: memref<384x128xf32, #tpu.memory_space<vmem>>, %arg9: memref<1x128xf32, #tpu.memory_space<vmem>>, %arg10: memref<2x128xf32, #tpu.memory_space<vmem>>) attributes {dimension_semantics = [], scalar_prefetch = 0 : i64, scratch_operands = 0 : i64, tpu.core_type = #tpu.core_type<tc>} {
    %c0 = arith.constant 0 : index
    %c0_0 = arith.constant 0 : index
    %c0_1 = arith.constant 0 : index
    %0 = vector.load %arg0[%c0, %c0_0, %c0_1] : memref<2x8x1xi32, #tpu.memory_space<vmem>>, vector<2x8x1xi32>
    %1 = tpu.iota {dimensions = array<i32: 2>} : vector<2x8x50xi32>
    %2 = vector.broadcast %0 : vector<2x8x1xi32> to vector<2x8x50xi32>
    %3 = arith.cmpi eq, %2, %1 : vector<2x8x50xi32>
    %cst = arith.constant 1.000000e+00 : f32
    %cst_2 = arith.constant 0.000000e+00 : f32
    %4 = vector.broadcast %cst : f32 to vector<2x8x50xf32>
    %5 = vector.broadcast %cst_2 : f32 to vector<2x8x50xf32>
    %6 = arith.select %3, %4, %5 : vector<2x8x50xi1>, vector<2x8x50xf32>
    %c0_3 = arith.constant 0 : index
    %c0_4 = arith.constant 0 : index
    %7 = vector.load %arg1[%c0_3, %c0_4] : memref<50x32xf32, #tpu.memory_space<vmem>>, vector<50x32xf32>
    %cst_5 = arith.constant dense<0.000000e+00> : vector<2x8x32xf32>
    %8 = tpu.matmul %6, %7, %cst_5 {dimension_numbers = #tpu.dot_dimension_numbers<[2], [0], [0, 1], [1], [0, 0, 0, 1, 1, 1], [], []>} : vector<2x8x50xf32>, vector<50x32xf32>, vector<2x8x32xf32> -> vector<2x8x32xf32>
    %9 = vector.extract_strided_slice %8 {offsets = [0, 0, 0], sizes = [2, 7, 32], strides = [1, 1, 1]} : vector<2x8x32xf32> to vector<2x7x32xf32>
    %10 = vector.extract_strided_slice %8 {offsets = [0, 1, 0], sizes = [2, 7, 32], strides = [1, 1, 1]} : vector<2x8x32xf32> to vector<2x7x32xf32>
    %11 = tpu.concatenate %9, %10 in 2 : vector<2x7x32xf32>, vector<2x7x32xf32> -> vector<2x7x64xf32>
    %c0_6 = arith.constant 0 : index
    %c0_7 = arith.constant 0 : index
    %12 = vector.load %arg2[%c0_6, %c0_7] : memref<64x128xf32, #tpu.memory_space<vmem>>, vector<64x128xf32>
    %cst_8 = arith.constant dense<0.000000e+00> : vector<2x7x128xf32>
    %13 = tpu.matmul %11, %12, %cst_8 {dimension_numbers = #tpu.dot_dimension_numbers<[2], [0], [0, 1], [1], [0, 0, 0, 1, 1, 1], [], []>} : vector<2x7x64xf32>, vector<64x128xf32>, vector<2x7x128xf32> -> vector<2x7x128xf32>
    %c0_9 = arith.constant 0 : index
    %c0_10 = arith.constant 0 : index
    %14 = vector.load %arg5[%c0_9, %c0_10] : memref<1x128xf32, #tpu.memory_space<vmem>>, vector<1x128xf32>
    %15 = vector.shape_cast %14 : vector<1x128xf32> to vector<1x1x128xf32>
    %16 = vector.broadcast %15 : vector<1x1x128xf32> to vector<2x7x128xf32>
    %17 = arith.addf %13, %16 : vector<2x7x128xf32>
    %cst_11 = arith.constant 0.000000e+00 : f32
    %18 = vector.broadcast %cst_11 : f32 to vector<2x7x128xf32>
    %19 = arith.maximumf %17, %18 : vector<2x7x128xf32>
    %cst_12 = arith.constant dense<0xFF800000> : vector<2x128xf32>
    %20 = vector.multi_reduction <maximumf>, %19, %cst_12 [1] : vector<2x7x128xf32> to vector<2x128xf32>
    %21 = vector.extract_strided_slice %8 {offsets = [0, 0, 0], sizes = [2, 6, 32], strides = [1, 1, 1]} : vector<2x8x32xf32> to vector<2x6x32xf32>
    %22 = vector.extract_strided_slice %8 {offsets = [0, 1, 0], sizes = [2, 6, 32], strides = [1, 1, 1]} : vector<2x8x32xf32> to vector<2x6x32xf32>
    %23 = vector.extract_strided_slice %8 {offsets = [0, 2, 0], sizes = [2, 6, 32], strides = [1, 1, 1]} : vector<2x8x32xf32> to vector<2x6x32xf32>
    %24 = tpu.concatenate %21, %22, %23 in 2 : vector<2x6x32xf32>, vector<2x6x32xf32>, vector<2x6x32xf32> -> vector<2x6x96xf32>
    %c0_13 = arith.constant 0 : index
    %c0_14 = arith.constant 0 : index
    %25 = vector.load %arg3[%c0_13, %c0_14] : memref<96x128xf32, #tpu.memory_space<vmem>>, vector<96x128xf32>
    %cst_15 = arith.constant dense<0.000000e+00> : vector<2x6x128xf32>
    %26 = tpu.matmul %24, %25, %cst_15 {dimension_numbers = #tpu.dot_dimension_numbers<[2], [0], [0, 1], [1], [0, 0, 0, 1, 1, 1], [], []>} : vector<2x6x96xf32>, vector<96x128xf32>, vector<2x6x128xf32> -> vector<2x6x128xf32>
    %c0_16 = arith.constant 0 : index
    %c0_17 = arith.constant 0 : index
    %27 = vector.load %arg6[%c0_16, %c0_17] : memref<1x128xf32, #tpu.memory_space<vmem>>, vector<1x128xf32>
    %28 = vector.shape_cast %27 : vector<1x128xf32> to vector<1x1x128xf32>
    %29 = vector.broadcast %28 : vector<1x1x128xf32> to vector<2x6x128xf32>
    %30 = arith.addf %26, %29 : vector<2x6x128xf32>
    %cst_18 = arith.constant 0.000000e+00 : f32
    %31 = vector.broadcast %cst_18 : f32 to vector<2x6x128xf32>
    %32 = arith.maximumf %30, %31 : vector<2x6x128xf32>
    %cst_19 = arith.constant dense<0xFF800000> : vector<2x128xf32>
    %33 = vector.multi_reduction <maximumf>, %32, %cst_19 [1] : vector<2x6x128xf32> to vector<2x128xf32>
    %34 = vector.extract_strided_slice %8 {offsets = [0, 0, 0], sizes = [2, 5, 32], strides = [1, 1, 1]} : vector<2x8x32xf32> to vector<2x5x32xf32>
    %35 = vector.extract_strided_slice %8 {offsets = [0, 1, 0], sizes = [2, 5, 32], strides = [1, 1, 1]} : vector<2x8x32xf32> to vector<2x5x32xf32>
    %36 = vector.extract_strided_slice %8 {offsets = [0, 2, 0], sizes = [2, 5, 32], strides = [1, 1, 1]} : vector<2x8x32xf32> to vector<2x5x32xf32>
    %37 = vector.extract_strided_slice %8 {offsets = [0, 3, 0], sizes = [2, 5, 32], strides = [1, 1, 1]} : vector<2x8x32xf32> to vector<2x5x32xf32>
    %38 = tpu.concatenate %34, %35, %36, %37 in 2 : vector<2x5x32xf32>, vector<2x5x32xf32>, vector<2x5x32xf32>, vector<2x5x32xf32> -> vector<2x5x128xf32>
    %c0_20 = arith.constant 0 : index
    %c0_21 = arith.constant 0 : index
    %39 = vector.load %arg4[%c0_20, %c0_21] : memref<128x128xf32, #tpu.memory_space<vmem>>, vector<128x128xf32>
    %cst_22 = arith.constant dense<0.000000e+00> : vector<2x5x128xf32>
    %40 = tpu.matmul %38, %39, %cst_22 {dimension_numbers = #tpu.dot_dimension_numbers<[2], [0], [0, 1], [1], [0, 0, 0, 1, 1, 1], [], []>} : vector<2x5x128xf32>, vector<128x128xf32>, vector<2x5x128xf32> -> vector<2x5x128xf32>
    %c0_23 = arith.constant 0 : index
    %c0_24 = arith.constant 0 : index
    %41 = vector.load %arg7[%c0_23, %c0_24] : memref<1x128xf32, #tpu.memory_space<vmem>>, vector<1x128xf32>
    %42 = vector.shape_cast %41 : vector<1x128xf32> to vector<1x1x128xf32>
    %43 = vector.broadcast %42 : vector<1x1x128xf32> to vector<2x5x128xf32>
    %44 = arith.addf %40, %43 : vector<2x5x128xf32>
    %cst_25 = arith.constant 0.000000e+00 : f32
    %45 = vector.broadcast %cst_25 : f32 to vector<2x5x128xf32>
    %46 = arith.maximumf %44, %45 : vector<2x5x128xf32>
    %cst_26 = arith.constant dense<0xFF800000> : vector<2x128xf32>
    %47 = vector.multi_reduction <maximumf>, %46, %cst_26 [1] : vector<2x5x128xf32> to vector<2x128xf32>
    %48 = tpu.concatenate %20, %33, %47 in 1 : vector<2x128xf32>, vector<2x128xf32>, vector<2x128xf32> -> vector<2x384xf32>
    %c0_27 = arith.constant 0 : index
    %c0_28 = arith.constant 0 : index
    %49 = vector.load %arg8[%c0_27, %c0_28] : memref<384x128xf32, #tpu.memory_space<vmem>>, vector<384x128xf32>
    %cst_29 = arith.constant dense<0.000000e+00> : vector<2x128xf32>
    %50 = tpu.matmul %48, %49, %cst_29 {dimension_numbers = #tpu.dot_dimension_numbers<[1], [0], [0], [1], [0, 0, 1, 1], [], []>} : vector<2x384xf32>, vector<384x128xf32>, vector<2x128xf32> -> vector<2x128xf32>
    %c0_30 = arith.constant 0 : index
    %c0_31 = arith.constant 0 : index
    %51 = vector.load %arg9[%c0_30, %c0_31] : memref<1x128xf32, #tpu.memory_space<vmem>>, vector<1x128xf32>
    %52 = vector.broadcast %51 : vector<1x128xf32> to vector<2x128xf32>
    %53 = arith.addf %50, %52 : vector<2x128xf32>
    %c0_32 = arith.constant 0 : index
    %c0_33 = arith.constant 0 : index
    %54 = vector.load %arg10[%c0_32, %c0_33] : memref<2x128xf32, #tpu.memory_space<vmem>>, vector<2x128xf32>
    tpu.vector_store %arg10[%c0_32, %c0_33], %53 {strides = array<i32>} : memref<2x128xf32, #tpu.memory_space<vmem>>, vector<2x128xf32>,
    return
  }
}

</mosaic_0001>

<llo_original>
// kernel: tpu_custom_call.1
$region0: #{tpu_custom_call.1}
  #allocation0 [shape = 'u32[]', space=smem, size = 0x4, offset = 0x4, fixed_abs, tag = 'smem constant byte address 0x4 - core index']
  #allocation1 [shape = 'u32[72,128]{1,0:T(1,128)}', space=vmem, size = 0x9000, scoped, tag = 'internal scratch']
  %s0 = inlined_call_operand.vmem [shape: s32[2,8,1], index: 0, kind: input, shape index: {}]
  %s1 = inlined_call_operand.vmem [shape: f32[50,32], index: 1, kind: input, shape index: {}]
  %s2 = inlined_call_operand.hbm [shape: f32[64,128], index: 2, kind: input, shape index: {}]
  %s3 = inlined_call_operand.vmem [shape: f32[96,128], index: 3, kind: input, shape index: {}]
  %s4 = inlined_call_operand.hbm [shape: f32[128,128], index: 4, kind: input, shape index: {}]
  %s5 = inlined_call_operand.vmem [shape: f32[1,128], index: 5, kind: input, shape index: {}]
  %s6 = inlined_call_operand.vmem [shape: f32[1,128], index: 6, kind: input, shape index: {}]
  %s7 = inlined_call_operand.vmem [shape: f32[1,128], index: 7, kind: input, shape index: {}]
  %s8 = inlined_call_operand.hbm [shape: f32[384,128], index: 8, kind: input, shape index: {}]
  %s9 = inlined_call_operand.vmem [shape: f32[1,128], index: 9, kind: input, shape index: {}]
  %s10 = inlined_call_operand.hbm [shape: f32[2,128], index: 10, kind: output, shape index: {}]
  %s11 = sld [smem:[#allocation0]]
  $region62: #{tpu_custom_call.1} parent=0
    _
  %s13 = ssub.s32 1, %s11
  %s14 = scalar_select 0, %s13, %s11
  $region1: #{tpu_custom_call.1} parent=0
    #allocation2 [shape = 'u8[32768]{0}', space=vmem, size = 0x8000, scoped, tag = 'input window, operand 2, single buffered']
    #allocation3 [shape = 's32[1]{0}', space=sflag, size = 0x4, scoped, tag = 'scoped memory for tpu_custom_call.1']
    #allocation4 [shape = 's32[1]{0}', space=sflag, size = 0x4, scoped, tag = 'scoped memory for tpu_custom_call.1']
    #allocation5 [shape = 'u8[65536]{0}', space=vmem, size = 0x10000, scoped, tag = 'input window, operand 4, single buffered']
    #allocation6 [shape = 's32[1]{0}', space=sflag, size = 0x4, scoped, tag = 'scoped memory for tpu_custom_call.1']
    #allocation7 [shape = 'u8[196608]{0}', space=vmem, size = 0x30000, scoped, tag = 'input window, operand 8, single buffered']
    #allocation8 [shape = 'u8[1024]{0}', space=vmem, size = 0x400, scoped, tag = 'output window, operand 0, single buffered']
    %15 = vsyncpa [#allocation3], 0
    %16 = vsyncpa [#allocation6], 0
    %17 = vsyncpa [#allocation4], 0
    // Predicated region
    $region2: #{tpu_custom_call.1} parent=1 // pred_check
      _
    $region3: #{tpu_custom_call.1} parent=1 // pred_check_branch
      %19 = sbr.rel (0) target = $region5
    $region4: #{tpu_custom_call.1} parent=1 // pred_region
      _
    $region5: #{tpu_custom_call.1} parent=1 // pred_fallthru
      _
    // Predicated region
    $region6: #{tpu_custom_call.1} parent=1 // pred_check
      _
    $region7: #{tpu_custom_call.1} parent=1 // pred_check_branch
      %21 = sbr.rel (0) target = $region9
    $region8: #{tpu_custom_call.1} parent=1 // pred_region
      _
    $region9: #{tpu_custom_call.1} parent=1 // pred_fallthru
      _
    // Predicated region
    $region10: #{tpu_custom_call.1} parent=1 // pred_check
      _
    $region11: #{tpu_custom_call.1} parent=1 // pred_check_branch
      %23 = sbr.rel (0) target = $region13
    $region12: #{tpu_custom_call.1} parent=1 // pred_region
      %25 = vsyncadd [#allocation3], 0
      %s26 = sshll.u32 %s2, 4
      %s27 = int_to_ptr.hbm [resolvable:$true] %s26
      %s28 = sshll.u32 [#allocation2], 4
      %s29 = int_to_ptr.vmem [resolvable:$true] %s28
      %34 = dma.hbm_to_vmem [thread:$0]  %s27, 1024, %s29, [#allocation3], 128, 128, 8
    $region13: #{tpu_custom_call.1} parent=1 // pred_fallthru
      _
    // Predicated region
    $region14: #{tpu_custom_call.1} parent=1 // pred_check
      _
    $region15: #{tpu_custom_call.1} parent=1 // pred_check_branch
      %36 = sbr.rel (0) target = $region17
    $region16: #{tpu_custom_call.1} parent=1 // pred_region
      _
    $region17: #{tpu_custom_call.1} parent=1 // pred_fallthru
      _
    // Predicated region
    $region18: #{tpu_custom_call.1} parent=1 // pred_check
      _
    $region19: #{tpu_custom_call.1} parent=1 // pred_check_branch
      %38 = sbr.rel (0) target = $region21
    $region20: #{tpu_custom_call.1} parent=1 // pred_region
      %40 = vsyncadd [#allocation6], 0
      %s41 = sshll.u32 %s4, 4
      %s42 = int_to_ptr.hbm [resolvable:$true] %s41
      %s43 = sshll.u32 [#allocation5], 4
      %s44 = int_to_ptr.vmem [resolvable:$true] %s43
      %49 = dma.hbm_to_vmem [thread:$0]  %s42, 2048, %s44, [#allocation6], 128, 128, 8
    $region21: #{tpu_custom_call.1} parent=1 // pred_fallthru
      _
    // Predicated region
    $region22: #{tpu_custom_call.1} parent=1 // pred_check
      _
    $region23: #{tpu_custom_call.1} parent=1 // pred_check_branch
      %51 = sbr.rel (0) target = $region25
    $region24: #{tpu_custom_call.1} parent=1 // pred_region
      _
    $region25: #{tpu_custom_call.1} parent=1 // pred_fallthru
      _
    // Predicated region
    $region26: #{tpu_custom_call.1} parent=1 // pred_check
      _
    $region27: #{tpu_custom_call.1} parent=1 // pred_check_branch
      %53 = sbr.rel (0) target = $region29
    $region28: #{tpu_custom_call.1} parent=1 // pred_region
      _
    $region29: #{tpu_custom_call.1} parent=1 // pred_fallthru
      _
    // Predicated region
    $region30: #{tpu_custom_call.1} parent=1 // pred_check
      _
    $region31: #{tpu_custom_call.1} parent=1 // pred_check_branch
      %55 = sbr.rel (0) target = $region33
    $region32: #{tpu_custom_call.1} parent=1 // pred_region
      _
    $region33: #{tpu_custom_call.1} parent=1 // pred_fallthru
      _
    // Predicated region
    $region34: #{tpu_custom_call.1} parent=1 // pred_check
      _
    $region35: #{tpu_custom_call.1} parent=1 // pred_check_branch
      %57 = sbr.rel (0) target = $region37
    $region36: #{tpu_custom_call.1} parent=1 // pred_region
      %59 = vsyncadd [#allocation6], 0
      %s60 = sshll.u32 %s8, 4
      %s61 = int_to_ptr.hbm [resolvable:$true] %s60
      %s62 = sshll.u32 [#allocation7], 4
      %s63 = int_to_ptr.vmem [resolvable:$true] %s62
      %68 = dma.hbm_to_vmem [thread:$0]  %s61, 6144, %s63, [#allocation6], 128, 128, 8
    $region37: #{tpu_custom_call.1} parent=1 // pred_fallthru
      _
    // Predicated region
    $region38: #{tpu_custom_call.1} parent=1 // pred_check
      _
    $region39: #{tpu_custom_call.1} parent=1 // pred_check_branch
      %70 = sbr.rel (0) target = $region41
    $region40: #{tpu_custom_call.1} parent=1 // pred_region
      _
    $region41: #{tpu_custom_call.1} parent=1 // pred_fallthru
      _
    // Predicated region
    $region42: #{tpu_custom_call.1} parent=1 // pred_check
      _
    $region43: #{tpu_custom_call.1} parent=1 // pred_check_branch
      %72 = sbr.rel (0) target = $region45
    $region44: #{tpu_custom_call.1} parent=1 // pred_region
      %74 = dma.done [#allocation3], 1024
    $region45: #{tpu_custom_call.1} parent=1 // pred_fallthru
      _
    // Predicated region
    $region46: #{tpu_custom_call.1} parent=1 // pred_check
      _
    $region47: #{tpu_custom_call.1} parent=1 // pred_check_branch
      %76 = sbr.rel (0) target = $region49
    $region48: #{tpu_custom_call.1} parent=1 // pred_region
      %78 = dma.done [#allocation6], 2048
    $region49: #{tpu_custom_call.1} parent=1 // pred_fallthru
      _
    // Predicated region
    $region50: #{tpu_custom_call.1} parent=1 // pred_check
      _
    $region51: #{tpu_custom_call.1} parent=1 // pred_check_branch
      %80 = sbr.rel (0) target = $region53
    $region52: #{tpu_custom_call.1} parent=1 // pred_region
      %82 = dma.done [#allocation6], 6144
    $region53: #{tpu_custom_call.1} parent=1 // pred_fallthru
      _
    %v83 = vld [vmem:[%s0] sm:$0xff]
    %v84 = vld [vmem:[%s0 + $0x8] sm:$0xff]
    %v85 = vlaneseq
    %v86 = vand.u32 %v85, 127
    %87 = vset.pattern.permute.xlu0 0
    %88 = vperm.xlu0 %87, %v83
    %v89 = vpop.permute.xlu0 %88
    %90 = vset.pattern.permute.xlu0 0
    %91 = vperm.xlu0 %90, %v84
    %v92 = vpop.permute.xlu0 %91
    %vm93 = vcmp.eq.s32.totalorder %v89, %v86
    %vm94 = vcmp.eq.s32.totalorder %v92, %v86
    %v95 = vsel %vm93, 1.0, 0.0
    %v96 = vsel %vm94, 1.0, 0.0
    %v97 = vld [vmem:[%s1] sm:$0xff]
    %v98 = vld [vmem:[%s1 + $0x8] sm:$0xff]
    %v99 = vld [vmem:[%s1 + $0x10] sm:$0xff]
    %v100 = vld [vmem:[%s1 + $0x18] sm:$0xff]
    %v101 = vld [vmem:[%s1 + $0x20] sm:$0xff]
    %v102 = vld [vmem:[%s1 + $0x28] sm:$0xff]
    %v103 = vld [vmem:[%s1 + $0x30] sm:$0x3]
    %vm104 = vcmask 408576
    %v106 = vsel %vm104, %v95, 0
    %v109 = vsel %vm104, %v96, 0
    %vm111 = vcmask 1041408
    %v113 = vsel %vm111, %v103, 0
    %115 = vmatpush.msra.mxu0 0.0
    %116 = vmatpush.msra.mxu0 0.0
    %117 = vmatpush.msra.mxu0 0.0
    %118 = vmatpush.msra.mxu0 0.0
    %119 = vmatpush.msra.mxu0 0.0
    %120 = vmatpush.msra.mxu0 0.0
    %121 = vmatpush.msra.mxu0 0.0
    %122 = vmatpush.msra.mxu0 0.0
    %123 = vmatpush.msra.mxu0 0.0
    %124 = vmatpush.msra.mxu0 %v113
    %125 = vmatpush.msra.mxu0 %v102
    %126 = vmatpush.msra.mxu0 %v101
    %127 = vmatpush.msra.mxu0 %v100
    %128 = vmatpush.msra.mxu0 %v99
    %129 = vmatpush.msra.mxu0 %v98
    %130 = vmatpush.msra.mxu0 %v97
    %131 = vmatmul.f32.gmra.mxu0 %v106
    %v132 = vpop.f32.mrf.mxu0
    %v133 = vadd.f32 0.0, %v132
    %134 = vmatmul.f32.gmra.mxu0 %v109
    %v135 = vpop.f32.mrf.mxu0
    %v136 = vadd.f32 0.0, %v135
    %137 = vdwg.mxu0
    %v140 = vrot.slane %v133, 1
    %v141 = vrot.slane %v136, 1
    %142 = vrot.lane.b32.xlu0 %v140, 32
    %v143 = vpop.permute.xlu0 %142
    %144 = vrot.lane.b32.xlu0 %v141, 32
    %v145 = vpop.permute.xlu0 %144
    %vm148 = vcmask 261120
    %v149 = vsel %vm148, %v133, %v143
    %v150 = vsel %vm148, %v136, %v145
    %v151 = vld [vmem:[#allocation2] sm:$0xff]
    %v152 = vld [vmem:[#allocation2 + $0x8] sm:$0xff]
    %v153 = vld [vmem:[#allocation2 + $0x10] sm:$0xff]
    %v154 = vld [vmem:[#allocation2 + $0x18] sm:$0xff]
    %v155 = vld [vmem:[#allocation2 + $0x20] sm:$0xff]
    %v156 = vld [vmem:[#allocation2 + $0x28] sm:$0xff]
    %v157 = vld [vmem:[#allocation2 + $0x30] sm:$0xff]
    %v158 = vld [vmem:[#allocation2 + $0x38] sm:$0xff]
    %v159 = vld [vmem:[%s5] sm:$0x1]
    %v161 = vperm.slane %v159, 0
    %v164 = vrot.slane %v149, 1
    %v165 = vrot.slane %v149, 2
    %v166 = vrot.slane %v149, 3
    %v167 = vrot.slane %v149, 4
    %v168 = vrot.slane %v149, 5
    %v169 = vrot.slane %v149, 6
    %v170 = vrot.slane %v150, 1
    %v171 = vrot.slane %v150, 2
    %v172 = vrot.slane %v150, 3
    %v173 = vrot.slane %v150, 4
    %v174 = vrot.slane %v150, 5
    %v175 = vrot.slane %v150, 6
    %v176 = vrot.slane %v161, 1
    %v177 = vrot.slane %v161, 2
    %v178 = vrot.slane %v161, 3
    %v179 = vrot.slane %v161, 4
    %v180 = vrot.slane %v161, 5
    %v181 = vrot.slane %v161, 6
    %182 = vst [vmem:[#allocation1] ss:$9 sm:$0xff] %v149
    %s183 = scalar_lea.vmem [#allocation1], 1
    %184 = vst [vmem:[%s183] ss:$9 sm:$0xff] %v164
    %s185 = scalar_lea.vmem [#allocation1], 2
    %186 = vst [vmem:[%s185] ss:$9 sm:$0xff] %v165
    %s187 = scalar_lea.vmem [#allocation1], 3
    %188 = vst [vmem:[%s187] ss:$9 sm:$0xff] %v166
    %s189 = scalar_lea.vmem [#allocation1], 4
    %190 = vst [vmem:[%s189] ss:$9 sm:$0xff] %v167
    %s191 = scalar_lea.vmem [#allocation1], 5
    %192 = vst [vmem:[%s191] ss:$9 sm:$0xff] %v168
    %s193 = scalar_lea.vmem [#allocation1], 6
    %194 = vst [vmem:[%s193] ss:$9 sm:$0xff] %v169
    %s195 = scalar_lea.vmem [#allocation1], 7
    %196 = vst [vmem:[%s195] ss:$9 sm:$0xff] %v150
    %v197 = vld [vmem:[#allocation1] sm:$0xff]
    %198 = vst [vmem:[#allocation1] ss:$9 sm:$0xff] %v170
    %199 = vst [vmem:[%s183] ss:$9 sm:$0xff] %v171
    %200 = vst [vmem:[%s185] ss:$9 sm:$0xff] %v172
    %201 = vst [vmem:[%s187] ss:$9 sm:$0xff] %v173
    %202 = vst [vmem:[%s189] ss:$9 sm:$0xff] %v174
    %203 = vst [vmem:[%s191] ss:$9 sm:$0xff] %v175
    %v204 = vld [vmem:[#allocation1] sm:$0xff]
    %205 = vst [vmem:[#allocation1] ss:$9 sm:$0xff] %v161
    %s206 = scalar_lea.vmem [#allocation1], 1
    %207 = vst [vmem:[%s206] ss:$9 sm:$0xff] %v176
    %s208 = scalar_lea.vmem [#allocation1], 2
    %209 = vst [vmem:[%s208] ss:$9 sm:$0xff] %v177
    %s210 = scalar_lea.vmem [#allocation1], 3
    %211 = vst [vmem:[%s210] ss:$9 sm:$0xff] %v178
    %s212 = scalar_lea.vmem [#allocation1], 4
    %213 = vst [vmem:[%s212] ss:$9 sm:$0xff] %v179
    %s214 = scalar_lea.vmem [#allocation1], 5
    %215 = vst [vmem:[%s214] ss:$9 sm:$0xff] %v180
    %s216 = scalar_lea.vmem [#allocation1], 6
    %217 = vst [vmem:[%s216] ss:$9 sm:$0xff] %v181
    %s218 = scalar_lea.vmem [#allocation1], 7
    %219 = vst [vmem:[%s218] ss:$9 sm:$0xff] %v161
    %v220 = vld [vmem:[#allocation1] sm:$0xff]
    %221 = vst [vmem:[#allocation1] ss:$9 sm:$0xff] %v176
    %222 = vst [vmem:[%s206] ss:$9 sm:$0xff] %v177
    %223 = vst [vmem:[%s208] ss:$9 sm:$0xff] %v178
    %224 = vst [vmem:[%s210] ss:$9 sm:$0xff] %v179
    %225 = vst [vmem:[%s212] ss:$9 sm:$0xff] %v180
    %226 = vst [vmem:[%s214] ss:$9 sm:$0xff] %v181
    %v227 = vld [vmem:[#allocation1] sm:$0xff]
    %vm230 = vcmask 523264
    %v231 = vsel %vm230, %v197, 0
    %v233 = vsel %vm230, %v204, 0
    %235 = vmatpush.msra.mxu0 0.0
    %236 = vmatpush.msra.mxu0 0.0
    %237 = vmatpush.msra.mxu0 0.0
    %238 = vmatpush.msra.mxu0 0.0
    %239 = vmatpush.msra.mxu0 0.0
    %240 = vmatpush.msra.mxu0 0.0
    %241 = vmatpush.msra.mxu0 0.0
    %242 = vmatpush.msra.mxu0 0.0
    %243 = vmatpush.msra.mxu0 %v158
    %244 = vmatpush.msra.mxu0 %v157
    %245 = vmatpush.msra.mxu0 %v156
    %246 = vmatpush.msra.mxu0 %v155
    %247 = vmatpush.msra.mxu0 %v154
    %248 = vmatpush.msra.mxu0 %v153
    %249 = vmatpush.msra.mxu0 %v152
    %250 = vmatpush.msra.mxu0 %v151
    %251 = vmatmul.f32.gmra.mxu0 %v231
    %v252 = vpop.f32.mrf.mxu0
    %v253 = vadd.f32 %v220, %v252
    %254 = vmatmul.f32.gmra.mxu0 %v233
    %v255 = vpop.f32.mrf.mxu0
    %v256 = vadd.f32 %v227, %v255
    %257 = vdwg.mxu0
    %v260 = vrot.slane %v253, 1
    %v261 = vrot.slane %v253, 2
    %v262 = vrot.slane %v253, 3
    %v263 = vrot.slane %v253, 4
    %v264 = vrot.slane %v253, 5
    %v265 = vrot.slane %v253, 6
    %v266 = vrot.slane %v253, 7
    %v267 = vrot.slane %v256, 1
    %v268 = vrot.slane %v256, 2
    %v269 = vrot.slane %v256, 3
    %v270 = vrot.slane %v256, 4
    %v271 = vrot.slane %v256, 5
    %v284 = vmax.f32 %v253, 0.0
    %v285 = vmax.f32 %v260, 0.0
    %v286 = vmax.f32 %v261, 0.0
    %v287 = vmax.f32 %v262, 0.0
    %v288 = vmax.f32 %v263, 0.0
    %v289 = vmax.f32 %v264, 0.0
    %v290 = vmax.f32 %v265, 0.0
    %v291 = vmax.f32 %v266, 0.0
    %v292 = vmax.f32 %v256, 0.0
    %v293 = vmax.f32 %v267, 0.0
    %v294 = vmax.f32 %v268, 0.0
    %v295 = vmax.f32 %v269, 0.0
    %v296 = vmax.f32 %v270, 0.0
    %v297 = vmax.f32 %v271, 0.0
    %312 = vst [vmem:[#allocation1] ss:$9 sm:$0xff] %v284
    %s313 = scalar_lea.vmem [#allocation1], 1
    %314 = vst [vmem:[%s313] ss:$9 sm:$0xff] %v285
    %s315 = scalar_lea.vmem [#allocation1], 2
    %316 = vst [vmem:[%s315] ss:$9 sm:$0xff] %v286
    %s317 = scalar_lea.vmem [#allocation1], 3
    %318 = vst [vmem:[%s317] ss:$9 sm:$0xff] %v287
    %s319 = scalar_lea.vmem [#allocation1], 4
    %320 = vst [vmem:[%s319] ss:$9 sm:$0xff] %v288
    %s321 = scalar_lea.vmem [#allocation1], 5
    %322 = vst [vmem:[%s321] ss:$9 sm:$0xff] %v289
    %s323 = scalar_lea.vmem [#allocation1], 6
    %324 = vst [vmem:[%s323] ss:$9 sm:$0xff] %v290
    %v325 = vld [vmem:[#allocation1] sm:$0xff]
    %326 = vst [vmem:[#allocation1] ss:$9 sm:$0xff] %v291
    %327 = vst [vmem:[%s313] ss:$9 sm:$0xff] %v292
    %328 = vst [vmem:[%s315] ss:$9 sm:$0xff] %v293
    %329 = vst [vmem:[%s317] ss:$9 sm:$0xff] %v294
    %330 = vst [vmem:[%s319] ss:$9 sm:$0xff] %v295
    %331 = vst [vmem:[%s321] ss:$9 sm:$0xff] %v296
    %332 = vst [vmem:[%s323] ss:$9 sm:$0xff] %v297
    %v333 = vld [vmem:[#allocation1] sm:$0xff]
    %vm336 = vcmask 1046528
    %v337 = vsel %vm336, %v325, -inf
    %v338 = vrot.slane %v337, 4
    %v339 = vmax.f32 %v337, %v338
    %v340 = vrot.slane %v339, 2
    %v341 = vmax.f32 %v339, %v340
    %v342 = vrot.slane %v341, 1
    %v343 = vmax.f32 %v341, %v342
    %v344 = vsel %vm336, %v333, -inf
    %v345 = vrot.slane %v344, 4
    %v346 = vmax.f32 %v344, %v345
    %v347 = vrot.slane %v346, 2
    %v348 = vmax.f32 %v346, %v347
    %v349 = vrot.slane %v348, 1
    %v350 = vmax.f32 %v348, %v349
    %v351 = vrot.slane %v133, 2
    %v352 = vrot.slane %v136, 2
    %353 = vrot.lane.b32.xlu0 %v351, 64
    %v354 = vpop.permute.xlu0 %353
    %355 = vrot.lane.b32.xlu0 %v352, 64
    %v356 = vpop.permute.xlu0 %355
    %v359 = vsel %vm230, %v149, %v354
    %v360 = vsel %vm230, %v150, %v356
    %v361 = vld [vmem:[%s3] sm:$0xff]
    %v362 = vld [vmem:[%s3 + $0x8] sm:$0xff]
    %v363 = vld [vmem:[%s3 + $0x10] sm:$0xff]
    %v364 = vld [vmem:[%s3 + $0x18] sm:$0xff]
    %v365 = vld [vmem:[%s3 + $0x20] sm:$0xff]
    %v366 = vld [vmem:[%s3 + $0x28] sm:$0xff]
    %v367 = vld [vmem:[%s3 + $0x30] sm:$0xff]
    %v368 = vld [vmem:[%s3 + $0x38] sm:$0xff]
    %v369 = vld [vmem:[%s3 + $0x40] sm:$0xff]
    %v370 = vld [vmem:[%s3 + $0x48] sm:$0xff]
    %v371 = vld [vmem:[%s3 + $0x50] sm:$0xff]
    %v372 = vld [vmem:[%s3 + $0x58] sm:$0xff]
    %v373 = vld [vmem:[%s6] sm:$0x1]
    %v375 = vperm.slane %v373, 0
    %v378 = vrot.slane %v359, 2
    %v379 = vrot.slane %v359, 4
    %v380 = vrot.slane %v360, 2
    %v381 = vrot.slane %v360, 4
    %v382 = vrot.slane %v375, 2
    %v383 = vrot.slane %v375, 4
    %384 = vst [vmem:[#allocation1] ss:$4 sm:$0xff] %v359
    %s385 = scalar_lea.vmem [#allocation1], 1
    %386 = vst [vmem:[%s385] ss:$4 sm:$0xff] %v378
    %s387 = scalar_lea.vmem [#allocation1], 2
    %388 = vst [vmem:[%s387] ss:$4 sm:$0xff] %v379
    %s389 = scalar_lea.vmem [#allocation1], 3
    %390 = vst [vmem:[%s389] ss:$4 sm:$0xff] %v360
    %s391 = scalar_lea.vmem [#allocation1], 32
    %392 = vst [vmem:[%s391] ss:$4 sm:$0xff] %v380
    %s393 = scalar_lea.vmem [#allocation1], 33
    %394 = vst [vmem:[%s393] ss:$4 sm:$0xff] %v381
    %v395 = vld.sshfl [vmem:[#allocation1] sm:$0xff pattern:$0x73625140]
    %v396 = vld.sshfl [vmem:[#allocation1 + $0x20] sm:$0xff pattern:$0x73625140]
    %397 = vst [vmem:[#allocation1] ss:$4 sm:$0xff] %v375
    %s398 = scalar_lea.vmem [#allocation1], 1
    %399 = vst [vmem:[%s398] ss:$4 sm:$0xff] %v382
    %s400 = scalar_lea.vmem [#allocation1], 2
    %401 = vst [vmem:[%s400] ss:$4 sm:$0xff] %v383
    %s402 = scalar_lea.vmem [#allocation1], 3
    %403 = vst [vmem:[%s402] ss:$4 sm:$0xff] %v375
    %s404 = scalar_lea.vmem [#allocation1], 32
    %405 = vst [vmem:[%s404] ss:$4 sm:$0xff] %v382
    %s406 = scalar_lea.vmem [#allocation1], 33
    %407 = vst [vmem:[%s406] ss:$4 sm:$0xff] %v383
    %v408 = vld.sshfl [vmem:[#allocation1] sm:$0xff pattern:$0x73625140]
    %v409 = vld.sshfl [vmem:[#allocation1 + $0x20] sm:$0xff pattern:$0x73625140]
    %vm412 = vcmask 785408
    %v413 = vsel %vm412, %v395, 0
    %v415 = vsel %vm412, %v396, 0
    %417 = vmatpush.msra.mxu0 0.0
    %418 = vmatpush.msra.mxu0 0.0
    %419 = vmatpush.msra.mxu0 0.0
    %420 = vmatpush.msra.mxu0 0.0
    %421 = vmatpush.msra.mxu0 %v372
    %422 = vmatpush.msra.mxu0 %v371
    %423 = vmatpush.msra.mxu0 %v370
    %424 = vmatpush.msra.mxu0 %v369
    %425 = vmatpush.msra.mxu0 %v368
    %426 = vmatpush.msra.mxu0 %v367
    %427 = vmatpush.msra.mxu0 %v366
    %428 = vmatpush.msra.mxu0 %v365
    %429 = vmatpush.msra.mxu0 %v364
    %430 = vmatpush.msra.mxu0 %v363
    %431 = vmatpush.msra.mxu0 %v362
    %432 = vmatpush.msra.mxu0 %v361
    %433 = vmatmul.f32.gmra.mxu0 %v413
    %v434 = vpop.f32.mrf.mxu0
    %v435 = vadd.f32 %v408, %v434
    %436 = vmatmul.f32.gmra.mxu0 %v415
    %v437 = vpop.f32.mrf.mxu0
    %v438 = vadd.f32 %v409, %v437
    %439 = vdwg.mxu0
    %v442 = vrot.slane %v435, 2
    %v443 = vrot.slane %v435, 4
    %v444 = vrot.slane %v435, 6
    %v445 = vrot.slane %v438, 2
    %v450 = vmax.f32 %v435, 0.0
    %v451 = vmax.f32 %v442, 0.0
    %v452 = vmax.f32 %v443, 0.0
    %v453 = vmax.f32 %v444, 0.0
    %v454 = vmax.f32 %v438, 0.0
    %v455 = vmax.f32 %v445, 0.0
    %462 = vst [vmem:[#allocation1] ss:$4 sm:$0xff] %v450
    %s463 = scalar_lea.vmem [#allocation1], 1
    %464 = vst [vmem:[%s463] ss:$4 sm:$0xff] %v451
    %s465 = scalar_lea.vmem [#allocation1], 2
    %466 = vst [vmem:[%s465] ss:$4 sm:$0xff] %v452
    %v467 = vld.sshfl [vmem:[#allocation1] sm:$0xff pattern:$0x73625140]
    %s468 = scalar_lea.vmem [#allocation1], 32
    %469 = vst [vmem:[%s468] ss:$4 sm:$0xff] %v453
    %s470 = scalar_lea.vmem [#allocation1], 33
    %471 = vst [vmem:[%s470] ss:$4 sm:$0xff] %v454
    %s472 = scalar_lea.vmem [#allocation1], 34
    %473 = vst [vmem:[%s472] ss:$4 sm:$0xff] %v455
    %v474 = vld.sshfl [vmem:[#allocation1 + $0x20] sm:$0xff pattern:$0x73625140]
    %vm477 = vcmask 1045504
    %v478 = vsel %vm477, %v467, -inf
    %v479 = vrot.slane %v478, 4
    %v480 = vmax.f32 %v478, %v479
    %v481 = vrot.slane %v480, 2
    %v482 = vmax.f32 %v480, %v481
    %v483 = vrot.slane %v482, 1
    %v484 = vmax.f32 %v482, %v483
    %v485 = vsel %vm477, %v474, -inf
    %v486 = vrot.slane %v485, 4
    %v487 = vmax.f32 %v485, %v486
    %v488 = vrot.slane %v487, 2
    %v489 = vmax.f32 %v487, %v488
    %v490 = vrot.slane %v489, 1
    %v491 = vmax.f32 %v489, %v490
    %v492 = vrot.slane %v133, 3
    %v493 = vrot.slane %v136, 3
    %494 = vrot.lane.b32.xlu0 %v492, 96
    %v495 = vpop.permute.xlu0 %494
    %496 = vrot.lane.b32.xlu0 %v493, 96
    %v497 = vpop.permute.xlu0 %496
    %v500 = vsel %vm412, %v359, %v495
    %v501 = vsel %vm412, %v360, %v497
    %v502 = vld [vmem:[#allocation5] sm:$0xff]
    %v503 = vld [vmem:[#allocation5 + $0x8] sm:$0xff]
    %v504 = vld [vmem:[#allocation5 + $0x10] sm:$0xff]
    %v505 = vld [vmem:[#allocation5 + $0x18] sm:$0xff]
    %v506 = vld [vmem:[#allocation5 + $0x20] sm:$0xff]
    %v507 = vld [vmem:[#allocation5 + $0x28] sm:$0xff]
    %v508 = vld [vmem:[#allocation5 + $0x30] sm:$0xff]
    %v509 = vld [vmem:[#allocation5 + $0x38] sm:$0xff]
    %v510 = vld [vmem:[#allocation5 + $0x40] sm:$0xff]
    %v511 = vld [vmem:[#allocation5 + $0x48] sm:$0xff]
    %v512 = vld [vmem:[#allocation5 + $0x50] sm:$0xff]
    %v513 = vld [vmem:[#allocation5 + $0x58] sm:$0xff]
    %v514 = vld [vmem:[#allocation5 + $0x60] sm:$0xff]
    %v515 = vld [vmem:[#allocation5 + $0x68] sm:$0xff]
    %v516 = vld [vmem:[#allocation5 + $0x70] sm:$0xff]
    %v517 = vld [vmem:[#allocation5 + $0x78] sm:$0xff]
    %v518 = vld [vmem:[%s7] sm:$0x1]
    %v520 = vperm.slane %v518, 0
    %v523 = vrot.slane %v500, 1
    %v524 = vrot.slane %v500, 2
    %v525 = vrot.slane %v500, 3
    %v526 = vrot.slane %v500, 4
    %v527 = vrot.slane %v501, 1
    %v528 = vrot.slane %v501, 2
    %v529 = vrot.slane %v501, 3
    %v530 = vrot.slane %v501, 4
    %v531 = vrot.slane %v520, 1
    %v532 = vrot.slane %v520, 2
    %v533 = vrot.slane %v520, 3
    %v534 = vrot.slane %v520, 4
    %535 = vst [vmem:[#allocation1] ss:$9 sm:$0xff] %v500
    %s536 = scalar_lea.vmem [#allocation1], 1
    %537 = vst [vmem:[%s536] ss:$9 sm:$0xff] %v523
    %s538 = scalar_lea.vmem [#allocation1], 2
    %539 = vst [vmem:[%s538] ss:$9 sm:$0xff] %v524
    %s540 = scalar_lea.vmem [#allocation1], 3
    %541 = vst [vmem:[%s540] ss:$9 sm:$0xff] %v525
    %s542 = scalar_lea.vmem [#allocation1], 4
    %543 = vst [vmem:[%s542] ss:$9 sm:$0xff] %v526
    %s544 = scalar_lea.vmem [#allocation1], 5
    %545 = vst [vmem:[%s544] ss:$9 sm:$0xff] %v501
    %s546 = scalar_lea.vmem [#allocation1], 6
    %547 = vst [vmem:[%s546] ss:$9 sm:$0xff] %v527
    %s548 = scalar_lea.vmem [#allocation1], 7
    %549 = vst [vmem:[%s548] ss:$9 sm:$0xff] %v528
    %v550 = vld [vmem:[#allocation1] sm:$0xff]
    %551 = vst [vmem:[#allocation1] ss:$9 sm:$0xff] %v529
    %552 = vst [vmem:[%s536] ss:$9 sm:$0xff] %v530
    %v553 = vld [vmem:[#allocation1] sm:$0xff]
    %556 = vst [vmem:[#allocation1] ss:$9 sm:$0xff] %v520
    %s557 = scalar_lea.vmem [#allocation1], 1
    %558 = vst [vmem:[%s557] ss:$9 sm:$0xff] %v531
    %s559 = scalar_lea.vmem [#allocation1], 2
    %560 = vst [vmem:[%s559] ss:$9 sm:$0xff] %v532
    %s561 = scalar_lea.vmem [#allocation1], 3
    %562 = vst [vmem:[%s561] ss:$9 sm:$0xff] %v533
    %s563 = scalar_lea.vmem [#allocation1], 4
    %564 = vst [vmem:[%s563] ss:$9 sm:$0xff] %v534
    %s565 = scalar_lea.vmem [#allocation1], 5
    %566 = vst [vmem:[%s565] ss:$9 sm:$0xff] %v520
    %s567 = scalar_lea.vmem [#allocation1], 6
    %568 = vst [vmem:[%s567] ss:$9 sm:$0xff] %v531
    %s569 = scalar_lea.vmem [#allocation1], 7
    %570 = vst [vmem:[%s569] ss:$9 sm:$0xff] %v532
    %v571 = vld [vmem:[#allocation1] sm:$0xff]
    %572 = vst [vmem:[#allocation1] ss:$9 sm:$0xff] %v533
    %573 = vst [vmem:[%s557] ss:$9 sm:$0xff] %v534
    %v574 = vld [vmem:[#allocation1] sm:$0xff]
    %577 = vmatpush.msra.mxu0 %v517
    %578 = vmatpush.msra.mxu0 %v516
    %579 = vmatpush.msra.mxu0 %v515
    %580 = vmatpush.msra.mxu0 %v514
    %581 = vmatpush.msra.mxu0 %v513
    %582 = vmatpush.msra.mxu0 %v512
    %583 = vmatpush.msra.mxu0 %v511
    %584 = vmatpush.msra.mxu0 %v510
    %585 = vmatpush.msra.mxu0 %v509
    %586 = vmatpush.msra.mxu0 %v508
    %587 = vmatpush.msra.mxu0 %v507
    %588 = vmatpush.msra.mxu0 %v506
    %589 = vmatpush.msra.mxu0 %v505
    %590 = vmatpush.msra.mxu0 %v504
    %591 = vmatpush.msra.mxu0 %v503
    %592 = vmatpush.msra.mxu0 %v502
    %593 = vmatmul.f32.gmra.mxu0 %v550
    %v594 = vpop.f32.mrf.mxu0
    %v595 = vadd.f32 %v571, %v594
    %596 = vmatmul.f32.gmra.mxu0 %v553
    %v597 = vpop.f32.mrf.mxu0
    %v598 = vadd.f32 %v574, %v597
    %599 = vdwg.mxu0
    %v602 = vrot.slane %v595, 1
    %v603 = vrot.slane %v595, 2
    %v604 = vrot.slane %v595, 3
    %v605 = vrot.slane %v595, 4
    %v606 = vrot.slane %v595, 5
    %v607 = vrot.slane %v595, 6
    %v608 = vrot.slane %v595, 7
    %v609 = vrot.slane %v598, 1
    %v618 = vmax.f32 %v595, 0.0
    %v619 = vmax.f32 %v602, 0.0
    %v620 = vmax.f32 %v603, 0.0
    %v621 = vmax.f32 %v604, 0.0
    %v622 = vmax.f32 %v605, 0.0
    %v623 = vmax.f32 %v606, 0.0
    %v624 = vmax.f32 %v607, 0.0
    %v625 = vmax.f32 %v608, 0.0
    %v626 = vmax.f32 %v598, 0.0
    %v627 = vmax.f32 %v609, 0.0
    %638 = vst [vmem:[#allocation1] ss:$9 sm:$0xff] %v618
    %s639 = scalar_lea.vmem [#allocation1], 1
    %640 = vst [vmem:[%s639] ss:$9 sm:$0xff] %v619
    %s641 = scalar_lea.vmem [#allocation1], 2
    %642 = vst [vmem:[%s641] ss:$9 sm:$0xff] %v620
    %s643 = scalar_lea.vmem [#allocation1], 3
    %644 = vst [vmem:[%s643] ss:$9 sm:$0xff] %v621
    %s645 = scalar_lea.vmem [#allocation1], 4
    %646 = vst [vmem:[%s645] ss:$9 sm:$0xff] %v622
    %v647 = vld [vmem:[#allocation1] sm:$0xff]
    %648 = vst [vmem:[#allocation1] ss:$9 sm:$0xff] %v623
    %649 = vst [vmem:[%s639] ss:$9 sm:$0xff] %v624
    %650 = vst [vmem:[%s641] ss:$9 sm:$0xff] %v625
    %651 = vst [vmem:[%s643] ss:$9 sm:$0xff] %v626
    %652 = vst [vmem:[%s645] ss:$9 sm:$0xff] %v627
    %v653 = vld [vmem:[#allocation1] sm:$0xff]
    %vm656 = vcmask 1044480
    %v657 = vsel %vm656, %v647, -inf
    %v658 = vrot.slane %v657, 4
    %v659 = vmax.f32 %v657, %v658
    %v660 = vrot.slane %v659, 2
    %v661 = vmax.f32 %v659, %v660
    %v662 = vrot.slane %v661, 1
    %v663 = vmax.f32 %v661, %v662
    %v664 = vsel %vm656, %v653, -inf
    %v665 = vrot.slane %v664, 4
    %v666 = vmax.f32 %v664, %v665
    %v667 = vrot.slane %v666, 2
    %v668 = vmax.f32 %v666, %v667
    %v669 = vrot.slane %v668, 1
    %v670 = vmax.f32 %v668, %v669
    %vm673 = vcmask 1041409
    %v674 = vsel %vm673, %v350, %v343
    %v678 = vsel %vm673, %v491, %v484
    %v682 = vsel %vm673, %v670, %v663
    %v684 = vld [vmem:[#allocation7] sm:$0xff]
    %v685 = vld [vmem:[#allocation7 + $0x8] sm:$0xff]
    %v686 = vld [vmem:[#allocation7 + $0x10] sm:$0xff]
    %v687 = vld [vmem:[#allocation7 + $0x18] sm:$0xff]
    %v688 = vld [vmem:[#allocation7 + $0x20] sm:$0xff]
    %v689 = vld [vmem:[#allocation7 + $0x28] sm:$0xff]
    %v690 = vld [vmem:[#allocation7 + $0x30] sm:$0xff]
    %v691 = vld [vmem:[#allocation7 + $0x38] sm:$0xff]
    %v692 = vld [vmem:[#allocation7 + $0x40] sm:$0xff]
    %v693 = vld [vmem:[#allocation7 + $0x48] sm:$0xff]
    %v694 = vld [vmem:[#allocation7 + $0x50] sm:$0xff]
    %v695 = vld [vmem:[#allocation7 + $0x58] sm:$0xff]
    %v696 = vld [vmem:[#allocation7 + $0x60] sm:$0xff]
    %v697 = vld [vmem:[#allocation7 + $0x68] sm:$0xff]
    %v698 = vld [vmem:[#allocation7 + $0x70] sm:$0xff]
    %v699 = vld [vmem:[#allocation7 + $0x78] sm:$0xff]
    %v700 = vld [vmem:[#allocation7 + $0x80] sm:$0xff]
    %v701 = vld [vmem:[#allocation7 + $0x88] sm:$0xff]
    %v702 = vld [vmem:[#allocation7 + $0x90] sm:$0xff]
    %v703 = vld [vmem:[#allocation7 + $0x98] sm:$0xff]
    %v704 = vld [vmem:[#allocation7 + $0xa0] sm:$0xff]
    %v705 = vld [vmem:[#allocation7 + $0xa8] sm:$0xff]
    %v706 = vld [vmem:[#allocation7 + $0xb0] sm:$0xff]
    %v707 = vld [vmem:[#allocation7 + $0xb8] sm:$0xff]
    %v708 = vld [vmem:[#allocation7 + $0xc0] sm:$0xff]
    %v709 = vld [vmem:[#allocation7 + $0xc8] sm:$0xff]
    %v710 = vld [vmem:[#allocation7 + $0xd0] sm:$0xff]
    %v711 = vld [vmem:[#allocation7 + $0xd8] sm:$0xff]
    %v712 = vld [vmem:[#allocation7 + $0xe0] sm:$0xff]
    %v713 = vld [vmem:[#allocation7 + $0xe8] sm:$0xff]
    %v714 = vld [vmem:[#allocation7 + $0xf0] sm:$0xff]
    %v715 = vld [vmem:[#allocation7 + $0xf8] sm:$0xff]
    %v716 = vld [vmem:[#allocation7 + $0x100] sm:$0xff]
    %v717 = vld [vmem:[#allocation7 + $0x108] sm:$0xff]
    %v718 = vld [vmem:[#allocation7 + $0x110] sm:$0xff]
    %v719 = vld [vmem:[#allocation7 + $0x118] sm:$0xff]
    %v720 = vld [vmem:[#allocation7 + $0x120] sm:$0xff]
    %v721 = vld [vmem:[#allocation7 + $0x128] sm:$0xff]
    %v722 = vld [vmem:[#allocation7 + $0x130] sm:$0xff]
    %v723 = vld [vmem:[#allocation7 + $0x138] sm:$0xff]
    %v724 = vld [vmem:[#allocation7 + $0x140] sm:$0xff]
    %v725 = vld [vmem:[#allocation7 + $0x148] sm:$0xff]
    %v726 = vld [vmem:[#allocation7 + $0x150] sm:$0xff]
    %v727 = vld [vmem:[#allocation7 + $0x158] sm:$0xff]
    %v728 = vld [vmem:[#allocation7 + $0x160] sm:$0xff]
    %v729 = vld [vmem:[#allocation7 + $0x168] sm:$0xff]
    %v730 = vld [vmem:[#allocation7 + $0x170] sm:$0xff]
    %v731 = vld [vmem:[#allocation7 + $0x178] sm:$0xff]
    %v732 = vld [vmem:[%s9] sm:$0x1]
    %v734 = vperm.slane %v732, 0
    %736 = vmatpush.msra.mxu0 %v699
    %737 = vmatpush.msra.mxu0 %v698
    %738 = vmatpush.msra.mxu0 %v697
    %739 = vmatpush.msra.mxu0 %v696
    %740 = vmatpush.msra.mxu0 %v695
    %741 = vmatpush.msra.mxu0 %v694
    %742 = vmatpush.msra.mxu0 %v693
    %743 = vmatpush.msra.mxu0 %v692
    %744 = vmatpush.msra.mxu0 %v691
    %745 = vmatpush.msra.mxu0 %v690
    %746 = vmatpush.msra.mxu0 %v689
    %747 = vmatpush.msra.mxu0 %v688
    %748 = vmatpush.msra.mxu0 %v687
    %749 = vmatpush.msra.mxu0 %v686
    %750 = vmatpush.msra.mxu0 %v685
    %751 = vmatpush.msra.mxu0 %v684
    %752 = vmatmul.f32.gmra.mxu0 %v674
    %v753 = vpop.f32.mrf.mxu0
    %v754 = vadd.f32 %v734, %v753
    %755 = vdwg.mxu0
    %756 = vmatpush.msra.mxu0 %v715
    %757 = vmatpush.msra.mxu0 %v714
    %758 = vmatpush.msra.mxu0 %v713
    %759 = vmatpush.msra.mxu0 %v712
    %760 = vmatpush.msra.mxu0 %v711
    %761 = vmatpush.msra.mxu0 %v710
    %762 = vmatpush.msra.mxu0 %v709
    %763 = vmatpush.msra.mxu0 %v708
    %764 = vmatpush.msra.mxu0 %v707
    %765 = vmatpush.msra.mxu0 %v706
    %766 = vmatpush.msra.mxu0 %v705
    %767 = vmatpush.msra.mxu0 %v704
    %768 = vmatpush.msra.mxu0 %v703
    %769 = vmatpush.msra.mxu0 %v702
    %770 = vmatpush.msra.mxu0 %v701
    %771 = vmatpush.msra.mxu0 %v700
    %772 = vmatmul.f32.gmra.mxu0 %v678
    %v773 = vpop.f32.mrf.mxu0
    %v774 = vadd.f32 %v754, %v773
    %775 = vdwg.mxu0
    %776 = vmatpush.msra.mxu0 %v731
    %777 = vmatpush.msra.mxu0 %v730
    %778 = vmatpush.msra.mxu0 %v729
    %779 = vmatpush.msra.mxu0 %v728
    %780 = vmatpush.msra.mxu0 %v727
    %781 = vmatpush.msra.mxu0 %v726
    %782 = vmatpush.msra.mxu0 %v725
    %783 = vmatpush.msra.mxu0 %v724
    %784 = vmatpush.msra.mxu0 %v723
    %785 = vmatpush.msra.mxu0 %v722
    %786 = vmatpush.msra.mxu0 %v721
    %787 = vmatpush.msra.mxu0 %v720
    %788 = vmatpush.msra.mxu0 %v719
    %789 = vmatpush.msra.mxu0 %v718
    %790 = vmatpush.msra.mxu0 %v717
    %791 = vmatpush.msra.mxu0 %v716
    %792 = vmatmul.f32.gmra.mxu0 %v682
    %v793 = vpop.f32.mrf.mxu0
    %v794 = vadd.f32 %v774, %v793
    %795 = vdwg.mxu0
    %796 = vst [vmem:[#allocation8] sm:$0x3] %v794
    // Predicated region
    $region54: #{tpu_custom_call.1} parent=1 // pred_check
      _
    $region55: #{tpu_custom_call.1} parent=1 // pred_check_branch
      %798 = sbr.rel (0) target = $region57
    $region56: #{tpu_custom_call.1} parent=1 // pred_region
      %800 = vsyncadd [#allocation4], 0
      %s802 = sshll.u32 [#allocation8], 4
      %s803 = int_to_ptr.vmem [resolvable:$true] %s802
      %s804 = sshll.u32 %s10, 4
      %s805 = int_to_ptr.hbm [resolvable:$true] %s804
      %807 = dma.vmem_to_hbm [thread:$0]  %s803, 32, %s805, [#allocation4]
    $region57: #{tpu_custom_call.1} parent=1 // pred_fallthru
      _
    // Predicated region
    $region58: #{tpu_custom_call.1} parent=1 // pred_check
      _
    $region59: #{tpu_custom_call.1} parent=1 // pred_check_branch
      %809 = sbr.rel (0) target = $region61
    $region60: #{tpu_custom_call.1} parent=1 // pred_region
      %811 = dma.done [#allocation4], 32
    $region61: #{tpu_custom_call.1} parent=1 // pred_fallthru
      _
    %812 = vsyncpa [#allocation3], 1
    %813 = vsyncpa [#allocation6], 1
    %814 = vsyncpa [#allocation4], 1

</llo_original>
